<compile_context>
chip_gen: v7x
topology: tpu7x:2x2x1
jax: 0.10.0
libtpu: 0.0.40
codegen_flags: <defaults>
</compile_context>

<pallas_src>
import jax
import jax.numpy as jnp
from jax.experimental import pallas as pl
from jax.experimental.pallas import tpu as pltpu


def _sublane_multiple(dtype):
    """Sublane tile multiple for lane-dense (unmasked) stores:
    8 for 32-bit, 16 for 16-bit, 32 for 8-bit dtypes."""
    itemsize = int(jnp.dtype(dtype).itemsize)
    return max(8, 32 // max(itemsize, 1))


def _detect_tpu():
    """Return (vmem_capacity_bytes, num_tensorcores) with conservative
    fallbacks (64 MiB / 1 TC) so a failed query never over-allocates VMEM."""
    vmem_cap = 64 << 20  # v7x-sized conservative fallback
    n_tc = 1
    try:
        info = pltpu.get_tpu_info()
        cap = getattr(info, "vmem_capacity_bytes", None)
        if cap:
            vmem_cap = int(cap)
        for name in ("num_tensorcores", "tensorcores_per_chip", "num_cores"):
            v = getattr(info, name, None)
            if isinstance(v, int) and v > 0:
                n_tc = v
                break
    except Exception:
        pass
    try:
        kind = jax.devices()[0].device_kind.lower()
        if "v7" in kind:
            n_tc = max(n_tc, 2)
    except Exception:
        pass
    return vmem_cap, n_tc


def _choose_tile(num_classes, feat_dim, dtype, per_block_bytes, n_tc):
    """Pick the row-tile: biggest sublane-aligned tile that fits the per-block
    byte budget; cdiv grid handles any class count (partial last block)."""
    sub = _sublane_multiple(dtype)
    itemsize = int(jnp.dtype(dtype).itemsize)
    row_bytes = max(feat_dim * itemsize, 1)
    total_bytes = num_classes * row_bytes

    # Largest sublane-aligned row count whose block fits the per-operand budget.
    rows_budget = max(sub, (per_block_bytes // row_bytes) // sub * sub)

    # Megacore: only on multi-TensorCore parts (v7x) and only for arrays big
    # enough to amortize extra grid steps; aim for >= 2 blocks per core so
    # both cores get work and double-buffering overlaps DMA with compute.
    if n_tc > 1 and total_bytes >= (8 << 20):
        per_step = pl.cdiv(num_classes, 2 * n_tc)
        per_step = ((per_step + sub - 1) // sub) * sub
        rows_budget = min(rows_budget, max(sub, per_step))

    if num_classes <= rows_budget:
        # Whole array as one block (block dims == array dims are always legal,
        # even when num_classes is not a sublane multiple). Single-TC chips
        # (v5e/v6e) take this path whenever it fits: the grid is a serial
        # loop there, so splitting would only add per-step overhead.
        return num_classes

    # cdiv grid; last block may be partial (masked) — correct for an
    # elementwise op and keeps the tile at budget size for any class count.
    return rows_budget


def _make_kernel(alpha, compute_dtype=jnp.float32):
    # alpha baked in as a compile-time constant (config constant in
    # TaskResLearner, so no retrace churn in practice).
    def _taskres_kernel(base_ref, res_ref, out_ref):
        b = base_ref[...].astype(compute_dtype)
        r = res_ref[...].astype(compute_dtype)
        out_ref[...] = (b + alpha * r).astype(out_ref.dtype)
    return _taskres_kernel


def taskres_forward(base_text_features, text_feature_residuals, alpha,
                    *, per_block_bytes=None, vmem_limit_bytes=None):
    """Compute base + alpha * residual with a Pallas elementwise kernel.

    base_text_features:     [num_classes, feat_dim] (frozen buffer)
    text_feature_residuals: [num_classes, feat_dim] (learnable, init zeros)
    alpha:                  python float (cfg.TRAINER.TaskRes.RESIDUAL_SCALE)
    per_block_bytes / vmem_limit_bytes: optional overrides; by default derived
    from the chip's VMEM capacity (3 streams x 2 pipeline buffers x block,
    with ~25% headroom under the scoped-VMEM limit).
    """
    assert base_text_features.shape == text_feature_residuals.shape
    assert base_text_features.ndim == 2
    num_classes, feat_dim = base_text_features.shape
    dtype = base_text_features.dtype

    vmem_cap, n_tc = _detect_tpu()
    if vmem_limit_bytes is None:
        vmem_limit_bytes = int(vmem_cap * 3 // 4)       # 48 MiB v7x, 96 MiB v5e/v6e
    if per_block_bytes is None:
        # 3 streams (base, res, out) x 2 pipeline buffers = 6 live blocks;
        # budget each at limit/8 to leave ~25% headroom.
        per_block_bytes = max(int(vmem_limit_bytes) // 8, 128 * 1024)

    tile_c = _choose_tile(num_classes, feat_dim, dtype, per_block_bytes, n_tc)
    grid = (pl.cdiv(num_classes, tile_c),)

    kernel = _make_kernel(float(alpha))

    return pl.pallas_call(
        kernel,
        out_shape=jax.ShapeDtypeStruct((num_classes, feat_dim), dtype),
        grid_spec=pltpu.PrefetchScalarGridSpec(
            num_scalar_prefetch=0,
            grid=grid,
            in_specs=[
                # Keep full feat_dim in the block -> lane-dense loads/stores.
                pl.BlockSpec((tile_c, feat_dim), lambda i: (i, 0)),
                pl.BlockSpec((tile_c, feat_dim), lambda i: (i, 0)),
            ],
            out_specs=pl.BlockSpec((tile_c, feat_dim), lambda i: (i, 0)),
        ),
        compiler_params=pltpu.CompilerParams(
            dimension_semantics=("parallel",),
            vmem_limit_bytes=int(vmem_limit_bytes),
        ),
    )(base_text_features, text_feature_residuals)


if __name__ == "__main__":
    key = jax.random.PRNGKey(0)
    k_base, k_res, k_b2, k_r2, k_b3, k_r3 = jax.random.split(key, 6)

    alpha = 0.5  # cfg.TRAINER.TaskRes.RESIDUAL_SCALE

    # Case 1: CLIP-like small shapes, whole array in a single grid step.
    num_classes, feat_dim = 16, 128
    base_text_features = jax.random.normal(
        k_base, (num_classes, feat_dim), dtype=jnp.float32)
    text_feature_residuals = 0.01 * jax.random.normal(
        k_res, (num_classes, feat_dim), dtype=jnp.float32)

    out = jax.block_until_ready(
        taskres_forward(base_text_features, text_feature_residuals, alpha))
    ref = base_text_features + alpha * text_feature_residuals
    assert jnp.allclose(out, ref, atol=1e-6), "mismatch vs reference (1-block)"

    # Case 2: true __init__ state (zero residuals -> identity on base).
    zero_res = jnp.zeros_like(base_text_features)
    out0 = jax.block_until_ready(
        taskres_forward(base_text_features, zero_res, alpha))
    assert jnp.allclose(out0, base_text_features, atol=1e-6)

    # Case 3: force the cdiv multi-step path with a partial last block
    # (100 classes, 32-row tiles -> 4 grid steps, last block = 4 rows).
    nc2, fd2 = 100, 256
    base2 = jax.random.normal(k_b2, (nc2, fd2), jnp.float32)
    res2 = 0.02 * jax.random.normal(k_r2, (nc2, fd2), jnp.float32)
    out2 = jax.block_until_ready(
        taskres_forward(base2, res2, alpha, per_block_bytes=32 * fd2 * 4))
    assert jnp.allclose(out2, base2 + alpha * res2, atol=1e-6), \
        "mismatch vs reference (cdiv tiled / partial block)"

    # Case 4: bf16-carried features, add computed in f32 inside the kernel.
    nc3, fd3 = 32, 128
    base3 = jax.random.normal(k_b3, (nc3, fd3), jnp.float32).astype(jnp.bfloat16)
    res3 = (0.05 * jax.random.normal(k_r3, (nc3, fd3), jnp.float32)
            ).astype(jnp.bfloat16)
    out3 = jax.block_until_ready(taskres_forward(base3, res3, alpha))
    ref3 = (base3.astype(jnp.float32) + alpha * res3.astype(jnp.float32)
            ).astype(jnp.bfloat16)
    assert jnp.allclose(out3.astype(jnp.float32), ref3.astype(jnp.float32),
                        atol=1e-2), "mismatch vs reference (bf16)"

    print("KERNEL_OK")
</pallas_src>

<mosaic_0001>
module attributes {stable_mosaic.version = 11 : i64} {
  func.func @_taskres_kernel(%arg0: i32, %arg1: memref<16x128xf32, #tpu.memory_space<vmem>>, %arg2: memref<16x128xf32, #tpu.memory_space<vmem>>, %arg3: memref<16x128xf32, #tpu.memory_space<vmem>>) attributes {dimension_semantics = [#tpu.dimension_semantics<parallel>], iteration_bounds = array<i64: 1>, scalar_prefetch = 0 : i64, scratch_operands = 0 : i64, tpu.core_type = #tpu.core_type<tc>, window_params = [{transform_indices = @transform_0, window_bounds = array<i64: 16, 128>}, {transform_indices = @transform_1, window_bounds = array<i64: 16, 128>}, {transform_indices = @transform_2, window_bounds = array<i64: 16, 128>}]} {
    %c0 = arith.constant 0 : index
    %c0_0 = arith.constant 0 : index
    %0 = vector.load %arg1[%c0, %c0_0] : memref<16x128xf32, #tpu.memory_space<vmem>>, vector<16x128xf32>
    %c0_1 = arith.constant 0 : index
    %c0_2 = arith.constant 0 : index
    %1 = vector.load %arg2[%c0_1, %c0_2] : memref<16x128xf32, #tpu.memory_space<vmem>>, vector<16x128xf32>
    %cst = arith.constant 5.000000e-01 : f32
    %2 = vector.broadcast %cst : f32 to vector<16x128xf32>
    %3 = arith.mulf %2, %1 : vector<16x128xf32>
    %4 = arith.addf %0, %3 : vector<16x128xf32>
    %c0_3 = arith.constant 0 : index
    %c0_4 = arith.constant 0 : index
    %5 = vector.load %arg3[%c0_3, %c0_4] : memref<16x128xf32, #tpu.memory_space<vmem>>, vector<16x128xf32>
    tpu.vector_store %arg3[%c0_3, %c0_4], %4 {strides = array<i32>} : memref<16x128xf32, #tpu.memory_space<vmem>>, vector<16x128xf32>,
    return
  }
  func.func @transform_0(%arg0: i32) -> (i32, i32) {
    %c0_i32 = arith.constant 0 : i32
    %c0_i32_0 = arith.constant 0 : i32
    return %arg0, %c0_i32 : i32, i32
  }
  func.func @transform_1(%arg0: i32) -> (i32, i32) {
    %c0_i32 = arith.constant 0 : i32
    %c0_i32_0 = arith.constant 0 : i32
    return %arg0, %c0_i32 : i32, i32
  }
  func.func @transform_2(%arg0: i32) -> (i32, i32) {
    %c0_i32 = arith.constant 0 : i32
    %c0_i32_0 = arith.constant 0 : i32
    return %arg0, %c0_i32 : i32, i32
  }
}

</mosaic_0001>

<llo_original>
// kernel: tpu_custom_call.1
$region0: #{tpu_custom_call.1}
  #allocation0 [shape = 'u32[]', space=smem, size = 0x4, offset = 0x4, fixed_abs, tag = 'smem constant byte address 0x4 - core index']
  #allocation1 [shape = 'u32[144,128]{1,0:T(1,128)}', space=vmem, size = 0x12000, scoped, tag = 'internal scratch']
  %s0 = inlined_call_operand.hbm [shape: f32[16,128], index: 0, kind: input, shape index: {}]
  %s1 = inlined_call_operand.hbm [shape: f32[16,128], index: 1, kind: input, shape index: {}]
  %s2 = inlined_call_operand.hbm [shape: f32[16,128], index: 2, kind: output, shape index: {}]
  %s3 = sld [smem:[#allocation0]]
  $region26: #{tpu_custom_call.1} parent=0
    _
  %s5 = ssub.s32 1, %s3
  %s6 = scalar_select 0, %s5, %s3
  $region1: #{tpu_custom_call.1} parent=0
    #allocation2 [shape = 'u8[8192]{0}', space=vmem, size = 0x2000, scoped, tag = 'input window, operand 0, single buffered']
    #allocation3 [shape = 's32[1]{0}', space=sflag, size = 0x4, scoped, tag = 'scoped memory for tpu_custom_call.1']
    #allocation4 [shape = 's32[1]{0}', space=sflag, size = 0x4, scoped, tag = 'scoped memory for tpu_custom_call.1']
    #allocation5 [shape = 'u8[8192]{0}', space=vmem, size = 0x2000, scoped, tag = 'input window, operand 1, single buffered']
    #allocation6 [shape = 's32[1]{0}', space=sflag, size = 0x4, scoped, tag = 'scoped memory for tpu_custom_call.1']
    #allocation7 [shape = 'u8[8192]{0}', space=vmem, size = 0x2000, scoped, tag = 'output window, operand 0, single buffered']
    %7 = vsyncpa [#allocation3], 0
    %8 = vsyncpa [#allocation6], 0
    %9 = vsyncpa [#allocation4], 0
    // Predicated region
    $region2: #{tpu_custom_call.1} parent=1 // pred_check
      _
    $region3: #{tpu_custom_call.1} parent=1 // pred_check_branch
      %11 = sbr.rel (0) target = $region5
    $region4: #{tpu_custom_call.1} parent=1 // pred_region
      %s13 = ssub.s32 256, 256
      %14 = vsyncadd [#allocation3], %s13
      %s15 = sshll.u32 [#allocation2], 4
      %s16 = int_to_ptr.vmem [resolvable:$true] %s15
      %21 = dma.hbm_to_vmem [thread:$0]  %s0, 256, %s16, [#allocation3], 128, 128, 8
    $region5: #{tpu_custom_call.1} parent=1 // pred_fallthru
      _
    // Predicated region
    $region6: #{tpu_custom_call.1} parent=1 // pred_check
      _
    $region7: #{tpu_custom_call.1} parent=1 // pred_check_branch
      %23 = sbr.rel (0) target = $region9
    $region8: #{tpu_custom_call.1} parent=1 // pred_region
      %s25 = ssub.s32 256, 256
      %26 = vsyncadd [#allocation6], %s25
      %s27 = sshll.u32 [#allocation5], 4
      %s28 = int_to_ptr.vmem [resolvable:$true] %s27
      %33 = dma.hbm_to_vmem [thread:$0]  %s1, 256, %s28, [#allocation6], 128, 128, 8
    $region9: #{tpu_custom_call.1} parent=1 // pred_fallthru
      _
    // Predicated region
    $region10: #{tpu_custom_call.1} parent=1 // pred_check
      _
    $region11: #{tpu_custom_call.1} parent=1 // pred_check_branch
      %35 = sbr.rel (0) target = $region13
    $region12: #{tpu_custom_call.1} parent=1 // pred_region
      %36 = dma.done [#allocation3], 256
    $region13: #{tpu_custom_call.1} parent=1 // pred_fallthru
      _
    // Predicated region
    $region14: #{tpu_custom_call.1} parent=1 // pred_check
      _
    $region15: #{tpu_custom_call.1} parent=1 // pred_check_branch
      %38 = sbr.rel (0) target = $region17
    $region16: #{tpu_custom_call.1} parent=1 // pred_region
      %39 = dma.done [#allocation6], 256
    $region17: #{tpu_custom_call.1} parent=1 // pred_fallthru
      _
    %v40 = vld [vmem:[#allocation2] sm:$0xff]
    %v41 = vld [vmem:[#allocation2 + $0x8] sm:$0xff]
    %v42 = vld [vmem:[#allocation5] sm:$0xff]
    %v43 = vld [vmem:[#allocation5 + $0x8] sm:$0xff]
    %v44 = vmul.f32 %v42, 0.5
    %v45 = vmul.f32 %v43, 0.5
    %v46 = vadd.f32 %v40, %v44
    %v47 = vadd.f32 %v41, %v45
    %48 = vst [vmem:[#allocation7] sm:$0xff] %v46
    %49 = vst [vmem:[#allocation7 + $0x8] sm:$0xff] %v47
    // Predicated region
    $region18: #{tpu_custom_call.1} parent=1 // pred_check
      _
    $region19: #{tpu_custom_call.1} parent=1 // pred_check_branch
      %51 = sbr.rel (0) target = $region21
    $region20: #{tpu_custom_call.1} parent=1 // pred_region
      %s53 = ssub.s32 256, 256
      %54 = vsyncadd [#allocation4], %s53
      %s55 = sshll.u32 [#allocation7], 4
      %s56 = int_to_ptr.vmem [resolvable:$true] %s55
      %61 = dma.vmem_to_hbm [thread:$0]  %s56, 256, %s2, [#allocation4], 128, 128, 8
    $region21: #{tpu_custom_call.1} parent=1 // pred_fallthru
      _
    // Predicated region
    $region22: #{tpu_custom_call.1} parent=1 // pred_check
      _
    $region23: #{tpu_custom_call.1} parent=1 // pred_check_branch
      %63 = sbr.rel (0) target = $region25
    $region24: #{tpu_custom_call.1} parent=1 // pred_region
      %64 = dma.done [#allocation4], 256
    $region25: #{tpu_custom_call.1} parent=1 // pred_fallthru
      _
    %65 = vsyncpa [#allocation3], 1
    %66 = vsyncpa [#allocation6], 1
    %67 = vsyncpa [#allocation4], 1

</llo_original>
